<compile_context>
chip_gen: v6e
topology: v6e:2x2x1
jax: 0.10.0
libtpu: 0.0.40
codegen_flags: <defaults>
</compile_context>

<pallas_src>
import functools

import jax
import jax.numpy as jnp
import numpy as np
from jax import lax
from jax.experimental import pallas as pl
from jax.experimental.pallas import tpu as pltpu

LANE = 128


def _round_up(x, m):
    return (x + m - 1) // m * m


# ----------------------------------------------------------------------------
# Phase 1 kernel: one row-tile of  h1 = relu(concat([A@X, X]) @ Wcat1 + b1)
# ----------------------------------------------------------------------------
def sage_layer1_kernel(a_ref, x_ref, wcat_ref, b_ref, h1_ref, *, tm):
    i = pl.program_id(0)
    row0 = pl.multiple_of(i * tm, tm)

    a_blk = a_ref[...]                           # (tm, N_pad)      bf16
    x_all = x_ref[...]                           # (N_pad, F_pad)   bf16
    x_tile = x_ref[pl.ds(row0, tm), :]           # (tm, F_pad)      bf16

    # mean aggregation (A is row-normalized) -> f32 accumulate on MXU
    agg = jnp.dot(a_blk, x_all, preferred_element_type=jnp.float32)
    # fused (lin_l | lin_r) matmul: concat along contraction dim
    z = jnp.concatenate([agg.astype(jnp.bfloat16), x_tile], axis=-1)
    h = jnp.dot(z, wcat_ref[...], preferred_element_type=jnp.float32) + b_ref[...]
    h = jnp.maximum(h, 0.0)                      # ReLU (f32 on VPU)
    # F.dropout(x, training=self.training): eval/inference -> identity.
    # TODO(synk): training-mode dropout would use pltpu.prng_seed/prng_random_bits.
    h1_ref[...] = h.astype(h1_ref.dtype)         # store bf16 for phase-2 MXU


# ----------------------------------------------------------------------------
# Phase 2 kernel: one row-tile of  h2 = concat([A@h1, h1]) @ Wcat2 + b2,
# plus masked log_softmax over the real class lanes.
# ----------------------------------------------------------------------------
def sage_layer2_kernel(a_ref, h1_ref, wcat_ref, b_ref, logp_ref, h2_ref,
                       *, tm, n_classes):
    i = pl.program_id(0)
    row0 = pl.multiple_of(i * tm, tm)

    a_blk = a_ref[...]                           # (tm, N_pad)      bf16
    h1_all = h1_ref[...]                         # (N_pad, H_pad)   bf16
    h1_tile = h1_ref[pl.ds(row0, tm), :]         # (tm, H_pad)      bf16

    agg = jnp.dot(a_blk, h1_all, preferred_element_type=jnp.float32)
    z = jnp.concatenate([agg.astype(jnp.bfloat16), h1_tile], axis=-1)
    h2 = jnp.dot(z, wcat_ref[...], preferred_element_type=jnp.float32) + b_ref[...]
    h2_ref[...] = h2                             # raw logits (padded lanes = 0)

    # log_softmax over dim=1, masking the padded class lanes
    col = lax.broadcasted_iota(jnp.int32, h2.shape, 1)
    h2m = jnp.where(col < n_classes, h2, jnp.float32(-1e30))
    m = jnp.max(h2m, axis=1, keepdims=True)
    lse = jnp.log(jnp.sum(jnp.exp(h2m - m), axis=1, keepdims=True)) + m
    logp_ref[...] = h2 - lse


# ----------------------------------------------------------------------------
# Wrapper: padding / weight packing / two pallas_calls
# ----------------------------------------------------------------------------
def sage_batched_forward(a_norm, x, params):
    n, f = x.shape
    h = params["wl1"].shape[1]
    c = params["wl2"].shape[1]

    # tiling geometry
    tm = 256 if n >= 256 else _round_up(n, 8)
    n_pad = _round_up(n, tm)
    f_pad = _round_up(f, LANE)
    h_pad = _round_up(h, LANE)
    c_pad = _round_up(c, LANE)
    grid = (n_pad // tm,)

    def pad2(arr, rows, cols):
        return jnp.pad(arr, ((0, rows - arr.shape[0]), (0, cols - arr.shape[1])))

    # bf16 MXU operands, f32 biases
    a_p = pad2(a_norm, n_pad, n_pad).astype(jnp.bfloat16)
    x_p = pad2(x, n_pad, f_pad).astype(jnp.bfloat16)
    wcat1 = jnp.concatenate(
        [pad2(params["wl1"], f_pad, h_pad), pad2(params["wr1"], f_pad, h_pad)],
        axis=0).astype(jnp.bfloat16)
    b1 = pad2(params["b1"], 1, h_pad).astype(jnp.float32)
    wcat2 = jnp.concatenate(
        [pad2(params["wl2"], h_pad, c_pad), pad2(params["wr2"], h_pad, c_pad)],
        axis=0).astype(jnp.bfloat16)
    b2 = pad2(params["b2"], 1, c_pad).astype(jnp.float32)

    def vmem_limit(resident_bytes):
        return int(min(max(2 * int(resident_bytes) + (2 << 20), 4 << 20), 64 << 20))

    # ---- phase 1: h1 ----
    res1 = (2 * tm * n_pad * 2        # A row tile, double buffered
            + n_pad * f_pad * 2       # X full
            + 2 * f_pad * h_pad * 2   # Wcat1
            + h_pad * 4               # b1
            + 2 * tm * h_pad * 2)     # h1 out tile, double buffered
    cost1 = pl.CostEstimate(
        flops=2 * n_pad * n_pad * f_pad + 2 * n_pad * (2 * f_pad) * h_pad,
        transcendentals=0,
        bytes_accessed=int(a_p.size * 2 + x_p.size * 2 + wcat1.size * 2
                           + b1.size * 4 + n_pad * h_pad * 2))
    h1 = pl.pallas_call(
        functools.partial(sage_layer1_kernel, tm=tm),
        out_shape=jax.ShapeDtypeStruct((n_pad, h_pad), jnp.bfloat16),
        grid=grid,
        in_specs=[
            pl.BlockSpec((tm, n_pad), lambda i: (i, 0)),
            pl.BlockSpec((n_pad, f_pad), lambda i: (0, 0)),
            pl.BlockSpec((2 * f_pad, h_pad), lambda i: (0, 0)),
            pl.BlockSpec((1, h_pad), lambda i: (0, 0)),
        ],
        out_specs=pl.BlockSpec((tm, h_pad), lambda i: (i, 0)),
        compiler_params=pltpu.CompilerParams(
            dimension_semantics=("parallel",),
            vmem_limit_bytes=vmem_limit(res1)),
        cost_estimate=cost1,
    )(a_p, x_p, wcat1, b1)

    # ---- phase 2: h2 + log_softmax ----
    res2 = (2 * tm * n_pad * 2
            + n_pad * h_pad * 2
            + 2 * h_pad * c_pad * 2
            + c_pad * 4
            + 2 * 2 * tm * c_pad * 4)
    cost2 = pl.CostEstimate(
        flops=2 * n_pad * n_pad * h_pad + 2 * n_pad * (2 * h_pad) * c_pad,
        transcendentals=n_pad * (c_pad + 1),
        bytes_accessed=int(a_p.size * 2 + n_pad * h_pad * 2 + wcat2.size * 2
                           + b2.size * 4 + 2 * n_pad * c_pad * 4))
    logp_p, h2_p = pl.pallas_call(
        functools.partial(sage_layer2_kernel, tm=tm, n_classes=c),
        out_shape=(jax.ShapeDtypeStruct((n_pad, c_pad), jnp.float32),
                   jax.ShapeDtypeStruct((n_pad, c_pad), jnp.float32)),
        grid=grid,
        in_specs=[
            pl.BlockSpec((tm, n_pad), lambda i: (i, 0)),
            pl.BlockSpec((n_pad, h_pad), lambda i: (0, 0)),
            pl.BlockSpec((2 * h_pad, c_pad), lambda i: (0, 0)),
            pl.BlockSpec((1, c_pad), lambda i: (0, 0)),
        ],
        out_specs=(pl.BlockSpec((tm, c_pad), lambda i: (i, 0)),
                   pl.BlockSpec((tm, c_pad), lambda i: (i, 0))),
        compiler_params=pltpu.CompilerParams(
            dimension_semantics=("parallel",),
            vmem_limit_bytes=vmem_limit(res2)),
        cost_estimate=cost2,
    )(a_p, h1, wcat2, b2)

    return logp_p[:n, :c], h2_p[:n, :c]


# ----------------------------------------------------------------------------
# Glue (plain JAX): dense normalized adjacency from edge_index, param init.
# ----------------------------------------------------------------------------
def build_norm_adj(edge_index, num_nodes):
    src, dst = edge_index[0], edge_index[1]
    # .add (not .set) so duplicate/parallel edges are counted like PyG scatter-mean
    a = jnp.zeros((num_nodes, num_nodes), jnp.float32).at[dst, src].add(1.0)
    deg = jnp.sum(a, axis=1, keepdims=True)
    return a / jnp.maximum(deg, 1.0)


def init_params(key, features, hidden, classes):
    ks = jax.random.split(key, 6)
    s = 0.1
    return {
        # weights stored pre-transposed as (in_dim, out_dim)
        "wl1": (jax.random.normal(ks[0], (features, hidden)) * s).astype(jnp.float32),
        "wr1": (jax.random.normal(ks[1], (features, hidden)) * s).astype(jnp.float32),
        "b1":  (jax.random.normal(ks[2], (1, hidden)) * s).astype(jnp.float32),
        "wl2": (jax.random.normal(ks[3], (hidden, classes)) * s).astype(jnp.float32),
        "wr2": (jax.random.normal(ks[4], (hidden, classes)) * s).astype(jnp.float32),
        "b2":  (jax.random.normal(ks[5], (1, classes)) * s).astype(jnp.float32),
    }


def reference_forward_f32(a_norm, x, p):
    h1 = jnp.maximum(a_norm @ x @ p["wl1"] + x @ p["wr1"] + p["b1"], 0.0)
    h2 = a_norm @ h1 @ p["wl2"] + h1 @ p["wr2"] + p["b2"]
    return jax.nn.log_softmax(h2, axis=1), h2


def reference_forward_bf16(a_norm, x, p):
    """Mirrors the kernel's dtype policy: bf16 MXU inputs, f32 accumulation."""
    bf = jnp.bfloat16
    a = a_norm.astype(bf)
    xb = x.astype(bf)
    agg1 = jnp.dot(a, xb, preferred_element_type=jnp.float32).astype(bf)
    h1 = (jnp.dot(agg1, p["wl1"].astype(bf), preferred_element_type=jnp.float32)
          + jnp.dot(xb, p["wr1"].astype(bf), preferred_element_type=jnp.float32)
          + p["b1"])
    h1 = jnp.maximum(h1, 0.0).astype(bf)
    agg2 = jnp.dot(a, h1, preferred_element_type=jnp.float32).astype(bf)
    h2 = (jnp.dot(agg2, p["wl2"].astype(bf), preferred_element_type=jnp.float32)
          + jnp.dot(h1, p["wr2"].astype(bf), preferred_element_type=jnp.float32)
          + p["b2"])
    return jax.nn.log_softmax(h2, axis=1), h2


if __name__ == "__main__":
    key = jax.random.PRNGKey(0)
    k_x, k_e, k_p = jax.random.split(key, 3)

    N, FEATURES, HIDDEN, CLASSES, E = 16, 8, 32, 4, 48

    x = jax.random.normal(k_x, (N, FEATURES), dtype=jnp.float32)
    edge_index = jax.random.randint(k_e, (2, E), 0, N, dtype=jnp.int32)

    a_norm = build_norm_adj(edge_index, N)
    params = init_params(k_p, FEATURES, HIDDEN, CLASSES)

    fwd = jax.jit(sage_batched_forward)
    logp, logits = fwd(a_norm, x, params)
    jax.block_until_ready((logp, logits))

    # Exact structural check vs a reference with the same bf16-input / f32-accum policy.
    ref_logp_bf, ref_logits_bf = reference_forward_bf16(a_norm, x, params)
    np.testing.assert_allclose(np.asarray(logits), np.asarray(ref_logits_bf),
                               rtol=1e-3, atol=1e-3)
    np.testing.assert_allclose(np.asarray(logp), np.asarray(ref_logp_bf),
                               rtol=1e-3, atol=1e-3)

    # Semantic parity vs the full-f32 reference (looser tolerance due to bf16 MXU inputs).
    ref_logp, ref_logits = reference_forward_f32(a_norm, x, params)
    np.testing.assert_allclose(np.asarray(logits), np.asarray(ref_logits),
                               rtol=3e-2, atol=3e-2)
    np.testing.assert_allclose(np.asarray(logp), np.asarray(ref_logp),
                               rtol=3e-2, atol=3e-2)

    print("KERNEL_OK")
</pallas_src>

<mosaic_0001>
module attributes {stable_mosaic.version = 11 : i64} {
  func.func @sage_layer1_kernel(%arg0: i32, %arg1: memref<16x16xbf16, #tpu.memory_space<vmem>>, %arg2: memref<16x128xbf16, #tpu.memory_space<vmem>>, %arg3: memref<256x128xbf16, #tpu.memory_space<vmem>>, %arg4: memref<1x128xf32, #tpu.memory_space<vmem>>, %arg5: memref<16x128xbf16, #tpu.memory_space<vmem>>) attributes {dimension_semantics = [#tpu.dimension_semantics<parallel>], iteration_bounds = array<i64: 1>, scalar_prefetch = 0 : i64, scratch_operands = 0 : i64, tpu.core_type = #tpu.core_type<tc>, window_params = [{transform_indices = @transform_0, window_bounds = array<i64: 16, 16>}, {pipeline_mode = #tpu.pipeline_mode<synchronous>, transform_indices = @transform_1, window_bounds = array<i64: 16, 128>}, {pipeline_mode = #tpu.pipeline_mode<synchronous>, transform_indices = @transform_2, window_bounds = array<i64: 256, 128>}, {pipeline_mode = #tpu.pipeline_mode<synchronous>, transform_indices = @transform_3, window_bounds = array<i64: 1, 128>}, {transform_indices = @transform_4, window_bounds = array<i64: 16, 128>}]} {
    %c16_i32 = arith.constant 16 : i32
    %0 = arith.muli %arg0, %c16_i32 : i32
    %1 = tpu.assume_multiple %0, 16 : i32
    %c0 = arith.constant 0 : index
    %c0_0 = arith.constant 0 : index
    %2 = vector.load %arg1[%c0, %c0_0] : memref<16x16xbf16, #tpu.memory_space<vmem>>, vector<16x16xbf16>
    %c0_1 = arith.constant 0 : index
    %c0_2 = arith.constant 0 : index
    %3 = vector.load %arg2[%c0_1, %c0_2] : memref<16x128xbf16, #tpu.memory_space<vmem>>, vector<16x128xbf16>
    %4 = arith.index_cast %1 : i32 to index
    %c0_3 = arith.constant 0 : index
    %5 = vector.load %arg2[%4, %c0_3] : memref<16x128xbf16, #tpu.memory_space<vmem>>, vector<16x128xbf16>
    %cst = arith.constant dense<0.000000e+00> : vector<16x128xf32>
    %6 = tpu.matmul %2, %3, %cst {dimension_numbers = #tpu.dot_dimension_numbers<[1], [0], [0], [1], [0, 0, 1, 1], [], []>} : vector<16x16xbf16>, vector<16x128xbf16>, vector<16x128xf32> -> vector<16x128xf32>
    %7 = arith.truncf %6 : vector<16x128xf32> to vector<16x128xbf16>
    %8 = tpu.concatenate %7, %5 in 1 : vector<16x128xbf16>, vector<16x128xbf16> -> vector<16x256xbf16>
    %c0_4 = arith.constant 0 : index
    %c0_5 = arith.constant 0 : index
    %9 = vector.load %arg3[%c0_4, %c0_5] : memref<256x128xbf16, #tpu.memory_space<vmem>>, vector<256x128xbf16>
    %cst_6 = arith.constant dense<0.000000e+00> : vector<16x128xf32>
    %10 = tpu.matmul %8, %9, %cst_6 {dimension_numbers = #tpu.dot_dimension_numbers<[1], [0], [0], [1], [0, 0, 1, 1], [], []>} : vector<16x256xbf16>, vector<256x128xbf16>, vector<16x128xf32> -> vector<16x128xf32>
    %c0_7 = arith.constant 0 : index
    %c0_8 = arith.constant 0 : index
    %11 = vector.load %arg4[%c0_7, %c0_8] : memref<1x128xf32, #tpu.memory_space<vmem>>, vector<1x128xf32>
    %12 = vector.broadcast %11 : vector<1x128xf32> to vector<16x128xf32>
    %13 = arith.addf %10, %12 : vector<16x128xf32>
    %cst_9 = arith.constant 0.000000e+00 : f32
    %14 = vector.broadcast %cst_9 : f32 to vector<16x128xf32>
    %15 = arith.maximumf %13, %14 : vector<16x128xf32>
    %16 = arith.truncf %15 : vector<16x128xf32> to vector<16x128xbf16>
    %c0_10 = arith.constant 0 : index
    %c0_11 = arith.constant 0 : index
    %17 = vector.load %arg5[%c0_10, %c0_11] : memref<16x128xbf16, #tpu.memory_space<vmem>>, vector<16x128xbf16>
    tpu.vector_store %arg5[%c0_10, %c0_11], %16 {strides = array<i32>} : memref<16x128xbf16, #tpu.memory_space<vmem>>, vector<16x128xbf16>,
    return
  }
  func.func @transform_0(%arg0: i32) -> (i32, i32) {
    %c0_i32 = arith.constant 0 : i32
    %c0_i32_0 = arith.constant 0 : i32
    return %arg0, %c0_i32 : i32, i32
  }
  func.func @transform_1(%arg0: i32) -> (i32, i32) {
    %c0_i32 = arith.constant 0 : i32
    %c0_i32_0 = arith.constant 0 : i32
    %c0_i32_1 = arith.constant 0 : i32
    return %c0_i32, %c0_i32_0 : i32, i32
  }
  func.func @transform_2(%arg0: i32) -> (i32, i32) {
    %c0_i32 = arith.constant 0 : i32
    %c0_i32_0 = arith.constant 0 : i32
    %c0_i32_1 = arith.constant 0 : i32
    return %c0_i32, %c0_i32_0 : i32, i32
  }
  func.func @transform_3(%arg0: i32) -> (i32, i32) {
    %c0_i32 = arith.constant 0 : i32
    %c0_i32_0 = arith.constant 0 : i32
    %c0_i32_1 = arith.constant 0 : i32
    return %c0_i32, %c0_i32_0 : i32, i32
  }
  func.func @transform_4(%arg0: i32) -> (i32, i32) {
    %c0_i32 = arith.constant 0 : i32
    %c0_i32_0 = arith.constant 0 : i32
    return %arg0, %c0_i32 : i32, i32
  }
}

module attributes {stable_mosaic.version = 11 : i64} {
  func.func @sage_layer2_kernel(%arg0: i32, %arg1: memref<16x16xbf16, #tpu.memory_space<vmem>>, %arg2: memref<16x128xbf16, #tpu.memory_space<vmem>>, %arg3: memref<256x128xbf16, #tpu.memory_space<vmem>>, %arg4: memref<1x128xf32, #tpu.memory_space<vmem>>, %arg5: memref<16x128xf32, #tpu.memory_space<vmem>>, %arg6: memref<16x128xf32, #tpu.memory_space<vmem>>) attributes {dimension_semantics = [#tpu.dimension_semantics<parallel>], iteration_bounds = array<i64: 1>, scalar_prefetch = 0 : i64, scratch_operands = 0 : i64, tpu.core_type = #tpu.core_type<tc>, window_params = [{transform_indices = @transform_0, window_bounds = array<i64: 16, 16>}, {pipeline_mode = #tpu.pipeline_mode<synchronous>, transform_indices = @transform_1, window_bounds = array<i64: 16, 128>}, {pipeline_mode = #tpu.pipeline_mode<synchronous>, transform_indices = @transform_2, window_bounds = array<i64: 256, 128>}, {pipeline_mode = #tpu.pipeline_mode<synchronous>, transform_indices = @transform_3, window_bounds = array<i64: 1, 128>}, {transform_indices = @transform_4, window_bounds = array<i64: 16, 128>}, {transform_indices = @transform_5, window_bounds = array<i64: 16, 128>}]} {
    %c16_i32 = arith.constant 16 : i32
    %0 = arith.muli %arg0, %c16_i32 : i32
    %1 = tpu.assume_multiple %0, 16 : i32
    %c0 = arith.constant 0 : index
    %c0_0 = arith.constant 0 : index
    %2 = vector.load %arg1[%c0, %c0_0] : memref<16x16xbf16, #tpu.memory_space<vmem>>, vector<16x16xbf16>
    %c0_1 = arith.constant 0 : index
    %c0_2 = arith.constant 0 : index
    %3 = vector.load %arg2[%c0_1, %c0_2] : memref<16x128xbf16, #tpu.memory_space<vmem>>, vector<16x128xbf16>
    %4 = arith.index_cast %1 : i32 to index
    %c0_3 = arith.constant 0 : index
    %5 = vector.load %arg2[%4, %c0_3] : memref<16x128xbf16, #tpu.memory_space<vmem>>, vector<16x128xbf16>
    %cst = arith.constant dense<0.000000e+00> : vector<16x128xf32>
    %6 = tpu.matmul %2, %3, %cst {dimension_numbers = #tpu.dot_dimension_numbers<[1], [0], [0], [1], [0, 0, 1, 1], [], []>} : vector<16x16xbf16>, vector<16x128xbf16>, vector<16x128xf32> -> vector<16x128xf32>
    %7 = arith.truncf %6 : vector<16x128xf32> to vector<16x128xbf16>
    %8 = tpu.concatenate %7, %5 in 1 : vector<16x128xbf16>, vector<16x128xbf16> -> vector<16x256xbf16>
    %c0_4 = arith.constant 0 : index
    %c0_5 = arith.constant 0 : index
    %9 = vector.load %arg3[%c0_4, %c0_5] : memref<256x128xbf16, #tpu.memory_space<vmem>>, vector<256x128xbf16>
    %cst_6 = arith.constant dense<0.000000e+00> : vector<16x128xf32>
    %10 = tpu.matmul %8, %9, %cst_6 {dimension_numbers = #tpu.dot_dimension_numbers<[1], [0], [0], [1], [0, 0, 1, 1], [], []>} : vector<16x256xbf16>, vector<256x128xbf16>, vector<16x128xf32> -> vector<16x128xf32>
    %c0_7 = arith.constant 0 : index
    %c0_8 = arith.constant 0 : index
    %11 = vector.load %arg4[%c0_7, %c0_8] : memref<1x128xf32, #tpu.memory_space<vmem>>, vector<1x128xf32>
    %12 = vector.broadcast %11 : vector<1x128xf32> to vector<16x128xf32>
    %13 = arith.addf %10, %12 : vector<16x128xf32>
    %c0_9 = arith.constant 0 : index
    %c0_10 = arith.constant 0 : index
    %14 = vector.load %arg6[%c0_9, %c0_10] : memref<16x128xf32, #tpu.memory_space<vmem>>, vector<16x128xf32>
    tpu.vector_store %arg6[%c0_9, %c0_10], %13 {strides = array<i32>} : memref<16x128xf32, #tpu.memory_space<vmem>>, vector<16x128xf32>,
    %15 = tpu.iota {dimensions = array<i32: 1>} : vector<16x128xi32>
    %c4_i32 = arith.constant 4 : i32
    %16 = vector.broadcast %c4_i32 : i32 to vector<16x128xi32>
    %17 = arith.cmpi slt, %15, %16 : vector<16x128xi32>
    %cst_11 = arith.constant -1.000000e+30 : f32
    %18 = vector.broadcast %cst_11 : f32 to vector<16x128xf32>
    %19 = arith.select %17, %13, %18 : vector<16x128xi1>, vector<16x128xf32>
    %cst_12 = arith.constant dense<0xFF800000> : vector<16xf32>
    %20 = vector.multi_reduction <maximumf>, %19, %cst_12 [1] : vector<16x128xf32> to vector<16xf32>
    %21 = vector.shape_cast %20 : vector<16xf32> to vector<16x1xf32>
    %22 = vector.broadcast %21 : vector<16x1xf32> to vector<16x128xf32>
    %23 = arith.subf %19, %22 : vector<16x128xf32>
    %24 = math.exp %23 : vector<16x128xf32>
    %cst_13 = arith.constant dense<0.000000e+00> : vector<16xf32>
    %25 = vector.multi_reduction <add>, %24, %cst_13 [1] : vector<16x128xf32> to vector<16xf32>
    %26 = vector.shape_cast %25 : vector<16xf32> to vector<16x1xf32>
    %27 = math.log %26 : vector<16x1xf32>
    %28 = arith.addf %27, %21 : vector<16x1xf32>
    %29 = vector.broadcast %28 : vector<16x1xf32> to vector<16x128xf32>
    %30 = arith.subf %13, %29 : vector<16x128xf32>
    %c0_14 = arith.constant 0 : index
    %c0_15 = arith.constant 0 : index
    %31 = vector.load %arg5[%c0_14, %c0_15] : memref<16x128xf32, #tpu.memory_space<vmem>>, vector<16x128xf32>
    tpu.vector_store %arg5[%c0_14, %c0_15], %30 {strides = array<i32>} : memref<16x128xf32, #tpu.memory_space<vmem>>, vector<16x128xf32>,
    return
  }
  func.func @transform_0(%arg0: i32) -> (i32, i32) {
    %c0_i32 = arith.constant 0 : i32
    %c0_i32_0 = arith.constant 0 : i32
    return %arg0, %c0_i32 : i32, i32
  }
  func.func @transform_1(%arg0: i32) -> (i32, i32) {
    %c0_i32 = arith.constant 0 : i32
    %c0_i32_0 = arith.constant 0 : i32
    %c0_i32_1 = arith.constant 0 : i32
    return %c0_i32, %c0_i32_0 : i32, i32
  }
  func.func @transform_2(%arg0: i32) -> (i32, i32) {
    %c0_i32 = arith.constant 0 : i32
    %c0_i32_0 = arith.constant 0 : i32
    %c0_i32_1 = arith.constant 0 : i32
    return %c0_i32, %c0_i32_0 : i32, i32
  }
  func.func @transform_3(%arg0: i32) -> (i32, i32) {
    %c0_i32 = arith.constant 0 : i32
    %c0_i32_0 = arith.constant 0 : i32
    %c0_i32_1 = arith.constant 0 : i32
    return %c0_i32, %c0_i32_0 : i32, i32
  }
  func.func @transform_4(%arg0: i32) -> (i32, i32) {
    %c0_i32 = arith.constant 0 : i32
    %c0_i32_0 = arith.constant 0 : i32
    return %arg0, %c0_i32 : i32, i32
  }
  func.func @transform_5(%arg0: i32) -> (i32, i32) {
    %c0_i32 = arith.constant 0 : i32
    %c0_i32_0 = arith.constant 0 : i32
    return %arg0, %c0_i32 : i32, i32
  }
}

</mosaic_0001>

<llo_original>
// kernel: sage_batched_forward.2
$region0: #{sage_batched_forward.2}
  #allocation0 [shape = 'u32[]', space=smem, size = 0x4, offset = 0x4, fixed_abs, tag = 'smem constant byte address 0x4 - core index']
  #allocation1 [shape = 'u32[144,128]{1,0:T(1,128)}', space=vmem, size = 0x12000, scoped, tag = 'internal scratch']
  %s0 = inlined_call_operand.vmem [shape: bf16[16,16], index: 0, kind: input, shape index: {}]
  %s1 = inlined_call_operand.vmem [shape: bf16[16,128], index: 1, kind: input, shape index: {}]
  %s2 = inlined_call_operand.vmem [shape: bf16[256,128], index: 2, kind: input, shape index: {}]
  %s3 = inlined_call_operand.vmem [shape: f32[1,128], index: 3, kind: input, shape index: {}]
  %s4 = inlined_call_operand.vmem [shape: bf16[16,128], index: 4, kind: output, shape index: {}]
  %s5 = sld [smem:[#allocation0]]
  $region26: #{sage_batched_forward.2} parent=0
    _
  %s7 = ssub.s32 1, %s5
  %s8 = scalar_select 0, %s7, %s5
  // Predicated region
  $region2: #{sage_batched_forward.2} parent=0 // pred_check
    _
  $region3: #{sage_batched_forward.2} parent=0 // pred_check_branch
    %10 = sbr.rel (0) target = $region5
  $region4: #{sage_batched_forward.2} parent=0 // pred_region
    _
  $region5: #{sage_batched_forward.2} parent=0 // pred_fallthru
    _
  // Predicated region
  $region6: #{sage_batched_forward.2} parent=0 // pred_check
    _
  $region7: #{sage_batched_forward.2} parent=0 // pred_check_branch
    %12 = sbr.rel (0) target = $region9
  $region8: #{sage_batched_forward.2} parent=0 // pred_region
    _
  $region9: #{sage_batched_forward.2} parent=0 // pred_fallthru
    _
  // Predicated region
  $region10: #{sage_batched_forward.2} parent=0 // pred_check
    _
  $region11: #{sage_batched_forward.2} parent=0 // pred_check_branch
    %14 = sbr.rel (0) target = $region13
  $region12: #{sage_batched_forward.2} parent=0 // pred_region
    _
  $region13: #{sage_batched_forward.2} parent=0 // pred_fallthru
    _
  // Predicated region
  $region14: #{sage_batched_forward.2} parent=0 // pred_check
    _
  $region15: #{sage_batched_forward.2} parent=0 // pred_check_branch
    %16 = sbr.rel (0) target = $region17
  $region16: #{sage_batched_forward.2} parent=0 // pred_region
    _
  $region17: #{sage_batched_forward.2} parent=0 // pred_fallthru
    _
  %s18 = smul.u32 0, 16
  %v19 = vld [vmem:[%s0] sm:$0xf]
  %v20 = vld [vmem:[%s0 + $0x4] sm:$0xf]
  %v21 = vld [vmem:[%s1] sm:$0xf]
  %v22 = vld [vmem:[%s1 + $0x4] sm:$0xf]
  %s23 = sshra.s32 %s18, 3
  %s24 = sand.u32 %s18, 7
  %s25 = smul.addr %s23, 4
  %s26 = scalar_lea.vmem %s1, %s25
  %v27 = vld [vmem:[%s26] sm:$0xf]
  %v28 = vld [vmem:[%s26 + $0x4] sm:$0xf]
  %v31 = vunpack.c.l.b16 %v19
  %v32 = vunpack.c.l.b16 %v20
  %v33 = vpack.c.b16 %v32, %v31
  %v36 = vunpack.c.l.b16 %v21
  %v37 = vunpack.c.l.b16 %v22
  %v38 = vpack.c.b16 %v37, %v36
  %vm40 = vcmask 130048
  %v42 = vsel %vm40, %v33, 0
  %44 = vmatprep.subr.bf16.mxu0 0
  %45 = vmatpush1.bf16.msra.mxu0 0
  %46 = vmatprep.subr.bf16.mxu0 0
  %47 = vmatpush1.bf16.msra.mxu0 0
  %48 = vmatprep.subr.bf16.mxu0 0
  %49 = vmatpush1.bf16.msra.mxu0 0
  %50 = vmatprep.subr.bf16.mxu0 0
  %51 = vmatpush1.bf16.msra.mxu0 0
  %52 = vmatprep.subr.bf16.mxu0 0
  %53 = vmatpush1.bf16.msra.mxu0 0
  %54 = vmatprep.subr.bf16.mxu0 0
  %55 = vmatpush1.bf16.msra.mxu0 0
  %56 = vmatprep.subr.bf16.mxu0 0
  %57 = vmatpush1.bf16.msra.mxu0 0
  %58 = vmatprep.subr.bf16.mxu0 0
  %59 = vmatpush1.bf16.msra.mxu0 %v38
  %60 = vmatprep.subr.bf16.mxu0 0
  %61 = vmatpush2.bf16.msra.mxu0 0
  %62 = vmatprep.subr.bf16.mxu0 0
  %63 = vmatpush2.bf16.msra.mxu0 0
  %64 = vmatprep.subr.bf16.mxu0 0
  %65 = vmatpush2.bf16.msra.mxu0 0
  %66 = vmatprep.subr.bf16.mxu0 0
  %67 = vmatpush2.bf16.msra.mxu0 0
  %68 = vmatprep.subr.bf16.mxu0 0
  %69 = vmatpush2.bf16.msra.mxu0 0
  %70 = vmatprep.subr.bf16.mxu0 0
  %71 = vmatpush2.bf16.msra.mxu0 0
  %72 = vmatprep.subr.bf16.mxu0 0
  %73 = vmatpush2.bf16.msra.mxu0 0
  %74 = vmatprep.subr.bf16.mxu0 0
  %75 = vmatpush2.bf16.msra.mxu0 0
  %76 = vmatprep.mubr.bf16.mxu0 0
  %77 = vmatmul.mubr.bf16.gmra.mxu0 %v42
  %v78 = vpop.f32.mrf.mxu0
  %v79 = vadd.f32 0.0, %v78
  %v80 = vpop.f32.mrf.mxu0
  %v81 = vpop.f32.mrf.mxu0
  %v82 = vadd.f32 0.0, %v81
  %v83 = vpop.f32.mrf.mxu0
  %84 = vdwg.mxu0
  %v85 = vpack.c.bf16 %v82, %v79
  %v88 = vunpack.c.l.b16 %v27
  %v89 = vunpack.c.l.b16 %v28
  %v90 = vpack.c.b16 %v89, %v88
  %v92 = vld [vmem:[%s2] sm:$0xf]
  %v93 = vld [vmem:[%s2 + $0x4] sm:$0xf]
  %v94 = vld [vmem:[%s2 + $0x8] sm:$0xf]
  %v95 = vld [vmem:[%s2 + $0xc] sm:$0xf]
  %v96 = vld [vmem:[%s2 + $0x10] sm:$0xf]
  %v97 = vld [vmem:[%s2 + $0x14] sm:$0xf]
  %v98 = vld [vmem:[%s2 + $0x18] sm:$0xf]
  %v99 = vld [vmem:[%s2 + $0x1c] sm:$0xf]
  %v100 = vld [vmem:[%s2 + $0x20] sm:$0xf]
  %v101 = vld [vmem:[%s2 + $0x24] sm:$0xf]
  %v102 = vld [vmem:[%s2 + $0x28] sm:$0xf]
  %v103 = vld [vmem:[%s2 + $0x2c] sm:$0xf]
  %v104 = vld [vmem:[%s2 + $0x30] sm:$0xf]
  %v105 = vld [vmem:[%s2 + $0x34] sm:$0xf]
  %v106 = vld [vmem:[%s2 + $0x38] sm:$0xf]
  %v107 = vld [vmem:[%s2 + $0x3c] sm:$0xf]
  %v108 = vld [vmem:[%s2 + $0x40] sm:$0xf]
  %v109 = vld [vmem:[%s2 + $0x44] sm:$0xf]
  %v110 = vld [vmem:[%s2 + $0x48] sm:$0xf]
  %v111 = vld [vmem:[%s2 + $0x4c] sm:$0xf]
  %v112 = vld [vmem:[%s2 + $0x50] sm:$0xf]
  %v113 = vld [vmem:[%s2 + $0x54] sm:$0xf]
  %v114 = vld [vmem:[%s2 + $0x58] sm:$0xf]
  %v115 = vld [vmem:[%s2 + $0x5c] sm:$0xf]
  %v116 = vld [vmem:[%s2 + $0x60] sm:$0xf]
  %v117 = vld [vmem:[%s2 + $0x64] sm:$0xf]
  %v118 = vld [vmem:[%s2 + $0x68] sm:$0xf]
  %v119 = vld [vmem:[%s2 + $0x6c] sm:$0xf]
  %v120 = vld [vmem:[%s2 + $0x70] sm:$0xf]
  %v121 = vld [vmem:[%s2 + $0x74] sm:$0xf]
  %v122 = vld [vmem:[%s2 + $0x78] sm:$0xf]
  %v123 = vld [vmem:[%s2 + $0x7c] sm:$0xf]
  %v124 = vld [vmem:[%s3] sm:$0x1]
  %v126 = vlaneseq
  %v127 = vshrl.u32 %v126, 7
  %v128 = vsub.s32 0, %v127
  %v129 = vrot.slane %v124, %v128
  %v163 = vunpack.c.l.b16 %v92
  %v164 = vunpack.c.l.b16 %v93
  %v165 = vunpack.c.l.b16 %v94
  %v166 = vunpack.c.l.b16 %v95
  %v167 = vunpack.c.l.b16 %v96
  %v168 = vunpack.c.l.b16 %v97
  %v169 = vunpack.c.l.b16 %v98
  %v170 = vunpack.c.l.b16 %v99
  %v171 = vunpack.c.l.b16 %v100
  %v172 = vunpack.c.l.b16 %v101
  %v173 = vunpack.c.l.b16 %v102
  %v174 = vunpack.c.l.b16 %v103
  %v175 = vunpack.c.l.b16 %v104
  %v176 = vunpack.c.l.b16 %v105
  %v177 = vunpack.c.l.b16 %v106
  %v178 = vunpack.c.l.b16 %v107
  %v179 = vunpack.c.l.b16 %v108
  %v180 = vunpack.c.l.b16 %v109
  %v181 = vunpack.c.l.b16 %v110
  %v182 = vunpack.c.l.b16 %v111
  %v183 = vunpack.c.l.b16 %v112
  %v184 = vunpack.c.l.b16 %v113
  %v185 = vunpack.c.l.b16 %v114
  %v186 = vunpack.c.l.b16 %v115
  %v187 = vunpack.c.l.b16 %v116
  %v188 = vunpack.c.l.b16 %v117
  %v189 = vunpack.c.l.b16 %v118
  %v190 = vunpack.c.l.b16 %v119
  %v191 = vunpack.c.l.b16 %v120
  %v192 = vunpack.c.l.b16 %v121
  %v193 = vunpack.c.l.b16 %v122
  %v194 = vunpack.c.l.b16 %v123
  %v195 = vpack.c.b16 %v164, %v163
  %v196 = vpack.c.b16 %v166, %v165
  %v197 = vpack.c.b16 %v168, %v167
  %v198 = vpack.c.b16 %v170, %v169
  %v199 = vpack.c.b16 %v172, %v171
  %v200 = vpack.c.b16 %v174, %v173
  %v201 = vpack.c.b16 %v176, %v175
  %v202 = vpack.c.b16 %v178, %v177
  %v203 = vpack.c.b16 %v180, %v179
  %v204 = vpack.c.b16 %v182, %v181
  %v205 = vpack.c.b16 %v184, %v183
  %v206 = vpack.c.b16 %v186, %v185
  %v207 = vpack.c.b16 %v188, %v187
  %v208 = vpack.c.b16 %v190, %v189
  %v209 = vpack.c.b16 %v192, %v191
  %v210 = vpack.c.b16 %v194, %v193
  %227 = vmatprep.subr.bf16.mxu0 0
  %228 = vmatpush1.bf16.msra.mxu0 %v202
  %229 = vmatprep.subr.bf16.mxu0 0
  %230 = vmatpush1.bf16.msra.mxu0 %v201
  %231 = vmatprep.subr.bf16.mxu0 0
  %232 = vmatpush1.bf16.msra.mxu0 %v200
  %233 = vmatprep.subr.bf16.mxu0 0
  %234 = vmatpush1.bf16.msra.mxu0 %v199
  %235 = vmatprep.subr.bf16.mxu0 0
  %236 = vmatpush1.bf16.msra.mxu0 %v198
  %237 = vmatprep.subr.bf16.mxu0 0
  %238 = vmatpush1.bf16.msra.mxu0 %v197
  %239 = vmatprep.subr.bf16.mxu0 0
  %240 = vmatpush1.bf16.msra.mxu0 %v196
  %241 = vmatprep.subr.bf16.mxu0 0
  %242 = vmatpush1.bf16.msra.mxu0 %v195
  %243 = vmatprep.subr.bf16.mxu0 0
  %244 = vmatpush2.bf16.msra.mxu0 %v210
  %245 = vmatprep.subr.bf16.mxu0 0
  %246 = vmatpush2.bf16.msra.mxu0 %v209
  %247 = vmatprep.subr.bf16.mxu0 0
  %248 = vmatpush2.bf16.msra.mxu0 %v208
  %249 = vmatprep.subr.bf16.mxu0 0
  %250 = vmatpush2.bf16.msra.mxu0 %v207
  %251 = vmatprep.subr.bf16.mxu0 0
  %252 = vmatpush2.bf16.msra.mxu0 %v206
  %253 = vmatprep.subr.bf16.mxu0 0
  %254 = vmatpush2.bf16.msra.mxu0 %v205
  %255 = vmatprep.subr.bf16.mxu0 0
  %256 = vmatpush2.bf16.msra.mxu0 %v204
  %257 = vmatprep.subr.bf16.mxu0 0
  %258 = vmatpush2.bf16.msra.mxu0 %v203
  %259 = vmatprep.mubr.bf16.mxu0 %v90
  %260 = vmatmul.mubr.bf16.gmra.mxu0 %v85
  %v261 = vpop.f32.mrf.mxu0
  %v262 = vadd.f32 %v129, %v261
  %v263 = vpop.f32.mrf.mxu0
  %v264 = vpop.f32.mrf.mxu0
  %v265 = vadd.f32 %v129, %v264
  %v266 = vpop.f32.mrf.mxu0
  %267 = vdwg.mxu0
  %v268 = vmax.f32 %v262, 0.0
  %v269 = vmax.f32 %v265, 0.0
  %v270 = vpack.c.bf16 %v269, %v268
  %v272 = vunpack.c.l.b16 %v270
  %v273 = vunpack.c.h.b16 %v270
  %v274 = vpack.c.b16 %v272, %v272
  %v275 = vpack.c.b16 %v273, %v273
  %278 = vst [vmem:[%s4] sm:$0xf] %v274
  %279 = vst [vmem:[%s4 + $0x4] sm:$0xf] %v275
  // Predicated region
  $region18: #{sage_batched_forward.2} parent=0 // pred_check
    _
  $region19: #{sage_batched_forward.2} parent=0 // pred_check_branch
    %281 = sbr.rel (0) target = $region21
  $region20: #{sage_batched_forward.2} parent=0 // pred_region
    _
  $region21: #{sage_batched_forward.2} parent=0 // pred_fallthru
    _
  // Predicated region
  $region22: #{sage_batched_forward.2} parent=0 // pred_check
    _
  $region23: #{sage_batched_forward.2} parent=0 // pred_check_branch
    %283 = sbr.rel (0) target = $region25
  $region24: #{sage_batched_forward.2} parent=0 // pred_region
    _
  $region25: #{sage_batched_forward.2} parent=0 // pred_fallthru
    _

// kernel: sage_batched_forward.3
$region0: #{sage_batched_forward.3}
  #allocation0 [shape = 'u32[]', space=smem, size = 0x4, offset = 0x4, fixed_abs, tag = 'smem constant byte address 0x4 - core index']
  #allocation1 [shape = 'u32[144,128]{1,0:T(1,128)}', space=vmem, size = 0x12000, scoped, tag = 'internal scratch']
  %s0 = inlined_call_operand.vmem [shape: bf16[16,16], index: 0, kind: input, shape index: {}]
  %s1 = inlined_call_operand.vmem [shape: bf16[16,128], index: 1, kind: input, shape index: {}]
  %s2 = inlined_call_operand.vmem [shape: bf16[256,128], index: 2, kind: input, shape index: {}]
  %s3 = inlined_call_operand.vmem [shape: f32[1,128], index: 3, kind: input, shape index: {}]
  %s4 = inlined_call_operand.vmem [shape: f32[16,128], index: 4, kind: output, shape index: {0}]
  %s5 = inlined_call_operand.vmem [shape: f32[16,128], index: 5, kind: output, shape index: {1}]
  %6 = xla_tuple %s4, %s5
  %s7 = sld [smem:[#allocation0]]
  $region34: #{sage_batched_forward.3} parent=0
    _
  %s9 = ssub.s32 1, %s7
  %s10 = scalar_select 0, %s9, %s7
  // Predicated region
  $region2: #{sage_batched_forward.3} parent=0 // pred_check
    _
  $region3: #{sage_batched_forward.3} parent=0 // pred_check_branch
    %12 = sbr.rel (0) target = $region5
  $region4: #{sage_batched_forward.3} parent=0 // pred_region
    _
  $region5: #{sage_batched_forward.3} parent=0 // pred_fallthru
    _
  // Predicated region
  $region6: #{sage_batched_forward.3} parent=0 // pred_check
    _
  $region7: #{sage_batched_forward.3} parent=0 // pred_check_branch
    %14 = sbr.rel (0) target = $region9
  $region8: #{sage_batched_forward.3} parent=0 // pred_region
    _
  $region9: #{sage_batched_forward.3} parent=0 // pred_fallthru
    _
  // Predicated region
  $region10: #{sage_batched_forward.3} parent=0 // pred_check
    _
  $region11: #{sage_batched_forward.3} parent=0 // pred_check_branch
    %16 = sbr.rel (0) target = $region13
  $region12: #{sage_batched_forward.3} parent=0 // pred_region
    _
  $region13: #{sage_batched_forward.3} parent=0 // pred_fallthru
    _
  // Predicated region
  $region14: #{sage_batched_forward.3} parent=0 // pred_check
    _
  $region15: #{sage_batched_forward.3} parent=0 // pred_check_branch
    %18 = sbr.rel (0) target = $region17
  $region16: #{sage_batched_forward.3} parent=0 // pred_region
    _
  $region17: #{sage_batched_forward.3} parent=0 // pred_fallthru
    _
  %s20 = smul.u32 0, 16
  %v21 = vld [vmem:[%s0] sm:$0xf]
  %v22 = vld [vmem:[%s0 + $0x4] sm:$0xf]
  %v23 = vld [vmem:[%s1] sm:$0xf]
  %v24 = vld [vmem:[%s1 + $0x4] sm:$0xf]
  %s25 = sshra.s32 %s20, 3
  %s26 = sand.u32 %s20, 7
  %s27 = smul.addr %s25, 4
  %s28 = scalar_lea.vmem %s1, %s27
  %v29 = vld [vmem:[%s28] sm:$0xf]
  %v30 = vld [vmem:[%s28 + $0x4] sm:$0xf]
  %v33 = vunpack.c.l.b16 %v21
  %v34 = vunpack.c.l.b16 %v22
  %v35 = vpack.c.b16 %v34, %v33
  %v38 = vunpack.c.l.b16 %v23
  %v39 = vunpack.c.l.b16 %v24
  %v40 = vpack.c.b16 %v39, %v38
  %vm42 = vcmask 130048
  %v44 = vsel %vm42, %v35, 0
  %46 = vmatprep.subr.bf16.mxu0 0
  %47 = vmatpush1.bf16.msra.mxu0 0
  %48 = vmatprep.subr.bf16.mxu0 0
  %49 = vmatpush1.bf16.msra.mxu0 0
  %50 = vmatprep.subr.bf16.mxu0 0
  %51 = vmatpush1.bf16.msra.mxu0 0
  %52 = vmatprep.subr.bf16.mxu0 0
  %53 = vmatpush1.bf16.msra.mxu0 0
  %54 = vmatprep.subr.bf16.mxu0 0
  %55 = vmatpush1.bf16.msra.mxu0 0
  %56 = vmatprep.subr.bf16.mxu0 0
  %57 = vmatpush1.bf16.msra.mxu0 0
  %58 = vmatprep.subr.bf16.mxu0 0
  %59 = vmatpush1.bf16.msra.mxu0 0
  %60 = vmatprep.subr.bf16.mxu0 0
  %61 = vmatpush1.bf16.msra.mxu0 %v40
  %62 = vmatprep.subr.bf16.mxu0 0
  %63 = vmatpush2.bf16.msra.mxu0 0
  %64 = vmatprep.subr.bf16.mxu0 0
  %65 = vmatpush2.bf16.msra.mxu0 0
  %66 = vmatprep.subr.bf16.mxu0 0
  %67 = vmatpush2.bf16.msra.mxu0 0
  %68 = vmatprep.subr.bf16.mxu0 0
  %69 = vmatpush2.bf16.msra.mxu0 0
  %70 = vmatprep.subr.bf16.mxu0 0
  %71 = vmatpush2.bf16.msra.mxu0 0
  %72 = vmatprep.subr.bf16.mxu0 0
  %73 = vmatpush2.bf16.msra.mxu0 0
  %74 = vmatprep.subr.bf16.mxu0 0
  %75 = vmatpush2.bf16.msra.mxu0 0
  %76 = vmatprep.subr.bf16.mxu0 0
  %77 = vmatpush2.bf16.msra.mxu0 0
  %78 = vmatprep.mubr.bf16.mxu0 0
  %79 = vmatmul.mubr.bf16.gmra.mxu0 %v44
  %v80 = vpop.f32.mrf.mxu0
  %v81 = vadd.f32 0.0, %v80
  %v82 = vpop.f32.mrf.mxu0
  %v83 = vpop.f32.mrf.mxu0
  %v84 = vadd.f32 0.0, %v83
  %v85 = vpop.f32.mrf.mxu0
  %86 = vdwg.mxu0
  %v87 = vpack.c.bf16 %v84, %v81
  %v90 = vunpack.c.l.b16 %v29
  %v91 = vunpack.c.l.b16 %v30
  %v92 = vpack.c.b16 %v91, %v90
  %v94 = vld [vmem:[%s2] sm:$0xf]
  %v95 = vld [vmem:[%s2 + $0x4] sm:$0xf]
  %v96 = vld [vmem:[%s2 + $0x8] sm:$0xf]
  %v97 = vld [vmem:[%s2 + $0xc] sm:$0xf]
  %v98 = vld [vmem:[%s2 + $0x10] sm:$0xf]
  %v99 = vld [vmem:[%s2 + $0x14] sm:$0xf]
  %v100 = vld [vmem:[%s2 + $0x18] sm:$0xf]
  %v101 = vld [vmem:[%s2 + $0x1c] sm:$0xf]
  %v102 = vld [vmem:[%s2 + $0x20] sm:$0xf]
  %v103 = vld [vmem:[%s2 + $0x24] sm:$0xf]
  %v104 = vld [vmem:[%s2 + $0x28] sm:$0xf]
  %v105 = vld [vmem:[%s2 + $0x2c] sm:$0xf]
  %v106 = vld [vmem:[%s2 + $0x30] sm:$0xf]
  %v107 = vld [vmem:[%s2 + $0x34] sm:$0xf]
  %v108 = vld [vmem:[%s2 + $0x38] sm:$0xf]
  %v109 = vld [vmem:[%s2 + $0x3c] sm:$0xf]
  %v110 = vld [vmem:[%s2 + $0x40] sm:$0xf]
  %v111 = vld [vmem:[%s2 + $0x44] sm:$0xf]
  %v112 = vld [vmem:[%s2 + $0x48] sm:$0xf]
  %v113 = vld [vmem:[%s2 + $0x4c] sm:$0xf]
  %v114 = vld [vmem:[%s2 + $0x50] sm:$0xf]
  %v115 = vld [vmem:[%s2 + $0x54] sm:$0xf]
  %v116 = vld [vmem:[%s2 + $0x58] sm:$0xf]
  %v117 = vld [vmem:[%s2 + $0x5c] sm:$0xf]
  %v118 = vld [vmem:[%s2 + $0x60] sm:$0xf]
  %v119 = vld [vmem:[%s2 + $0x64] sm:$0xf]
  %v120 = vld [vmem:[%s2 + $0x68] sm:$0xf]
  %v121 = vld [vmem:[%s2 + $0x6c] sm:$0xf]
  %v122 = vld [vmem:[%s2 + $0x70] sm:$0xf]
  %v123 = vld [vmem:[%s2 + $0x74] sm:$0xf]
  %v124 = vld [vmem:[%s2 + $0x78] sm:$0xf]
  %v125 = vld [vmem:[%s2 + $0x7c] sm:$0xf]
  %v126 = vld [vmem:[%s3] sm:$0x1]
  %v128 = vlaneseq
  %v129 = vshrl.u32 %v128, 7
  %v130 = vsub.s32 0, %v129
  %v131 = vrot.slane %v126, %v130
  %v165 = vunpack.c.l.b16 %v94
  %v166 = vunpack.c.l.b16 %v95
  %v167 = vunpack.c.l.b16 %v96
  %v168 = vunpack.c.l.b16 %v97
  %v169 = vunpack.c.l.b16 %v98
  %v170 = vunpack.c.l.b16 %v99
  %v171 = vunpack.c.l.b16 %v100
  %v172 = vunpack.c.l.b16 %v101
  %v173 = vunpack.c.l.b16 %v102
  %v174 = vunpack.c.l.b16 %v103
  %v175 = vunpack.c.l.b16 %v104
  %v176 = vunpack.c.l.b16 %v105
  %v177 = vunpack.c.l.b16 %v106
  %v178 = vunpack.c.l.b16 %v107
  %v179 = vunpack.c.l.b16 %v108
  %v180 = vunpack.c.l.b16 %v109
  %v181 = vunpack.c.l.b16 %v110
  %v182 = vunpack.c.l.b16 %v111
  %v183 = vunpack.c.l.b16 %v112
  %v184 = vunpack.c.l.b16 %v113
  %v185 = vunpack.c.l.b16 %v114
  %v186 = vunpack.c.l.b16 %v115
  %v187 = vunpack.c.l.b16 %v116
  %v188 = vunpack.c.l.b16 %v117
  %v189 = vunpack.c.l.b16 %v118
  %v190 = vunpack.c.l.b16 %v119
  %v191 = vunpack.c.l.b16 %v120
  %v192 = vunpack.c.l.b16 %v121
  %v193 = vunpack.c.l.b16 %v122
  %v194 = vunpack.c.l.b16 %v123
  %v195 = vunpack.c.l.b16 %v124
  %v196 = vunpack.c.l.b16 %v125
  %v197 = vpack.c.b16 %v166, %v165
  %v198 = vpack.c.b16 %v168, %v167
  %v199 = vpack.c.b16 %v170, %v169
  %v200 = vpack.c.b16 %v172, %v171
  %v201 = vpack.c.b16 %v174, %v173
  %v202 = vpack.c.b16 %v176, %v175
  %v203 = vpack.c.b16 %v178, %v177
  %v204 = vpack.c.b16 %v180, %v179
  %v205 = vpack.c.b16 %v182, %v181
  %v206 = vpack.c.b16 %v184, %v183
  %v207 = vpack.c.b16 %v186, %v185
  %v208 = vpack.c.b16 %v188, %v187
  %v209 = vpack.c.b16 %v190, %v189
  %v210 = vpack.c.b16 %v192, %v191
  %v211 = vpack.c.b16 %v194, %v193
  %v212 = vpack.c.b16 %v196, %v195
  %229 = vmatprep.subr.bf16.mxu0 0
  %230 = vmatpush1.bf16.msra.mxu0 %v204
  %231 = vmatprep.subr.bf16.mxu0 0
  %232 = vmatpush1.bf16.msra.mxu0 %v203
  %233 = vmatprep.subr.bf16.mxu0 0
  %234 = vmatpush1.bf16.msra.mxu0 %v202
  %235 = vmatprep.subr.bf16.mxu0 0
  %236 = vmatpush1.bf16.msra.mxu0 %v201
  %237 = vmatprep.subr.bf16.mxu0 0
  %238 = vmatpush1.bf16.msra.mxu0 %v200
  %239 = vmatprep.subr.bf16.mxu0 0
  %240 = vmatpush1.bf16.msra.mxu0 %v199
  %241 = vmatprep.subr.bf16.mxu0 0
  %242 = vmatpush1.bf16.msra.mxu0 %v198
  %243 = vmatprep.subr.bf16.mxu0 0
  %244 = vmatpush1.bf16.msra.mxu0 %v197
  %245 = vmatprep.subr.bf16.mxu0 0
  %246 = vmatpush2.bf16.msra.mxu0 %v212
  %247 = vmatprep.subr.bf16.mxu0 0
  %248 = vmatpush2.bf16.msra.mxu0 %v211
  %249 = vmatprep.subr.bf16.mxu0 0
  %250 = vmatpush2.bf16.msra.mxu0 %v210
  %251 = vmatprep.subr.bf16.mxu0 0
  %252 = vmatpush2.bf16.msra.mxu0 %v209
  %253 = vmatprep.subr.bf16.mxu0 0
  %254 = vmatpush2.bf16.msra.mxu0 %v208
  %255 = vmatprep.subr.bf16.mxu0 0
  %256 = vmatpush2.bf16.msra.mxu0 %v207
  %257 = vmatprep.subr.bf16.mxu0 0
  %258 = vmatpush2.bf16.msra.mxu0 %v206
  %259 = vmatprep.subr.bf16.mxu0 0
  %260 = vmatpush2.bf16.msra.mxu0 %v205
  %261 = vmatprep.mubr.bf16.mxu0 %v92
  %262 = vmatmul.mubr.bf16.gmra.mxu0 %v87
  %v263 = vpop.f32.mrf.mxu0
  %v264 = vadd.f32 %v131, %v263
  %v265 = vpop.f32.mrf.mxu0
  %v266 = vpop.f32.mrf.mxu0
  %v267 = vadd.f32 %v131, %v266
  %v268 = vpop.f32.mrf.mxu0
  %269 = vdwg.mxu0
  %270 = vst [vmem:[%s5] sm:$0xff] %v264
  %271 = vst [vmem:[%s5 + $0x8] sm:$0xff] %v267
  %v272 = vlaneseq
  %v273 = vand.u32 %v272, 127
  %vm274 = vcmp.lt.s32.totalorder %v273, 4
  %v275 = vsel %vm274, %v264, -1e+30
  %v276 = vsel %vm274, %v267, -1e+30
  %277 = vmax.xlane.f32.xlu0 %v275
  %v278 = vpop.xlane.xlu0 %277
  %279 = vmax.xlane.f32.xlu0 %v276
  %v280 = vpop.xlane.xlu0 %279
  %v281 = vsub.f32 %v275, %v278
  %v282 = vsub.f32 %v276, %v280
  %v283 = vmul.f32 %v281, 1.442695
  %v284 = vpow.pop %v283
  %v285 = vmul.f32 %v282, 1.442695
  %v286 = vpow.pop %v285
  %287 = vadd.xlane.f32.xlu0 %v284
  %v288 = vpop.xlane.xlu0 %287
  %289 = vadd.xlane.f32.xlu0 %v286
  %v290 = vpop.xlane.xlu0 %289
  %v291 = vlog2.pop %v288
  %v292 = vmul.f32 %v291, 0.6931472
  %v293 = vlog2.pop %v290
  %v294 = vmul.f32 %v293, 0.6931472
  %v295 = vadd.f32 %v292, %v278
  %v296 = vadd.f32 %v294, %v280
  %v297 = vsub.f32 %v264, %v295
  %v298 = vsub.f32 %v267, %v296
  %299 = vst [vmem:[%s4] sm:$0xff] %v297
  %300 = vst [vmem:[%s4 + $0x8] sm:$0xff] %v298
  // Predicated region
  $region18: #{sage_batched_forward.3} parent=0 // pred_check
    _
  $region19: #{sage_batched_forward.3} parent=0 // pred_check_branch
    %302 = sbr.rel (0) target = $region21
  $region20: #{sage_batched_forward.3} parent=0 // pred_region
    _
  $region21: #{sage_batched_forward.3} parent=0 // pred_fallthru
    _
  // Predicated region
  $region22: #{sage_batched_forward.3} parent=0 // pred_check
    _
  $region23: #{sage_batched_forward.3} parent=0 // pred_check_branch
    %304 = sbr.rel (0) target = $region25
  $region24: #{sage_batched_forward.3} parent=0 // pred_region
    _
  $region25: #{sage_batched_forward.3} parent=0 // pred_fallthru
    _
  // Predicated region
  $region26: #{sage_batched_forward.3} parent=0 // pred_check
    _
  $region27: #{sage_batched_forward.3} parent=0 // pred_check_branch
    %306 = sbr.rel (0) target = $region29
  $region28: #{sage_batched_forward.3} parent=0 // pred_region
    _
  $region29: #{sage_batched_forward.3} parent=0 // pred_fallthru
    _
  // Predicated region
  $region30: #{sage_batched_forward.3} parent=0 // pred_check
    _
  $region31: #{sage_batched_forward.3} parent=0 // pred_check_branch
    %308 = sbr.rel (0) target = $region33
  $region32: #{sage_batched_forward.3} parent=0 // pred_region
    _
  $region33: #{sage_batched_forward.3} parent=0 // pred_fallthru
    _

</llo_original>
